<compile_context>
chip_gen: v5e
topology: v5e:2x2
jax: 0.10.0
libtpu: 0.0.40
codegen_flags: <defaults>
</compile_context>

<pallas_src>
import jax
import jax.numpy as jnp
from jax.experimental import pallas as pl
from jax.experimental.pallas import tpu as pltpu

USE_RELU = False   # args.use_relu == 0 -> nn.Tanh()
MXU_BF16 = True    # bf16 MXU operands (f32 accumulation); gate math stays f32


def _critic_rnn_kernel(x_ref, h0_ref, w1_ref, wgru_ref, consts_ref,
                       values_ref, hfin_ref, h_scr):
    t = pl.program_id(0)

    @pl.when(t == 0)
    def _():
        h_scr[...] = h0_ref[...]

    H = h_scr.shape[1]

    # Packed f32 constants: rows = [b1, b_r, b_z, b_in, b_hn, w2_row, b2_row, pad]
    b1 = consts_ref[0:1, :]
    b_r = consts_ref[1:2, :]
    b_z = consts_ref[2:3, :]
    b_in = consts_ref[3:4, :]
    b_hn = consts_ref[4:5, :]
    w2_row = consts_ref[5:6, :]
    b2 = consts_ref[6:7, :][:, 0:1]          # (1, 1)

    x = x_ref[...][0]                        # (B, D_in), f32
    h = h_scr[...]                           # (B, H), f32 carry

    mxu_dt = jnp.bfloat16 if MXU_BF16 else jnp.float32

    # ---- fc1 + activation (MXU, f32 accumulate) -------------------------------
    a = jnp.dot(x.astype(mxu_dt), w1_ref[...],
                preferred_element_type=jnp.float32) + b1
    a = jnp.maximum(a, 0.0) if USE_RELU else jnp.tanh(a)

    # ---- GRUCell: one fused gate matmul ---------------------------------------
    #   g = [a, h] @ [[W_ir, W_iz, W_in,    0 ],
    #                 [W_hr, W_hz,    0, W_hn]]          -> (B, 4H)
    ah = jnp.concatenate([a.astype(mxu_dt), h.astype(mxu_dt)], axis=1)
    g = jnp.dot(ah, wgru_ref[...], preferred_element_type=jnp.float32)

    r = jax.nn.sigmoid(g[:, 0:H] + b_r)                  # gi_r + gh_r + (b_ir+b_hr)
    z = jax.nn.sigmoid(g[:, H:2 * H] + b_z)              # gi_z + gh_z + (b_iz+b_hz)
    n = jnp.tanh(g[:, 2 * H:3 * H] + b_in + r * (g[:, 3 * H:4 * H] + b_hn))
    h_new = (1.0 - z) * n + z * h

    # ---- fc2 on VPU + lane reduction (frees the MXU) ---------------------------
    v = jnp.sum(h_new * w2_row, axis=1, keepdims=True) + b2        # (B, 1)

    h_scr[...] = h_new
    hfin_ref[...] = h_new                    # resident output block; cheap VMEM store
    values_ref[...] = v[None, :, :]          # (1, B, 1) block for this timestep


def critic_rnn_forward(x_seq, h0, w1, w_gru, consts):
    """Run the critic over a trajectory. Returns (values[T,B,1], final_hidden[B,H])."""
    T, B, D_in = x_seq.shape
    H = h0.shape[1]

    flops = T * (2 * B * D_in * H + 2 * B * (2 * H) * (4 * H) + 12 * B * H)
    transcendentals = T * 4 * B * H
    bytes_accessed = (x_seq.size * x_seq.dtype.itemsize
                      + w1.size * w1.dtype.itemsize
                      + w_gru.size * w_gru.dtype.itemsize
                      + consts.size * 4 + h0.size * 4
                      + T * B * 4 + B * H * 4)

    return pl.pallas_call(
        _critic_rnn_kernel,
        out_shape=(
            jax.ShapeDtypeStruct((T, B, 1), jnp.float32),
            jax.ShapeDtypeStruct((B, H), jnp.float32),
        ),
        grid=(T,),
        in_specs=[
            pl.BlockSpec((1, B, D_in), lambda t: (t, 0, 0)),   # x_t: streamed per step
            pl.BlockSpec((B, H), lambda t: (0, 0)),            # h0: resident
            pl.BlockSpec((D_in, H), lambda t: (0, 0)),         # w1: resident
            pl.BlockSpec((2 * H, 4 * H), lambda t: (0, 0)),    # fused gate weights
            pl.BlockSpec((8, H), lambda t: (0, 0)),            # packed biases/w2/b2
        ],
        out_specs=(
            pl.BlockSpec((1, B, 1), lambda t: (t, 0, 0)),      # per-step value row
            pl.BlockSpec((B, H), lambda t: (0, 0)),            # final hidden (resident)
        ),
        scratch_shapes=[pltpu.VMEM((B, H), jnp.float32)],      # hidden-state carry
        compiler_params=pltpu.CompilerParams(
            dimension_semantics=("arbitrary",)),               # time is sequential
        cost_estimate=pl.CostEstimate(
            flops=flops, transcendentals=transcendentals,
            bytes_accessed=bytes_accessed),
    )(x_seq, h0, w1, w_gru, consts)


critic_rnn_forward = jax.jit(critic_rnn_forward)


# ----------------------------- parameter building -----------------------------

def _orthogonal(key, shape, gain=1.0):
    """Deterministic orthogonal init (torch.nn.init.orthogonal_-style)."""
    rows, cols = shape
    n = max(rows, cols)
    a = jax.random.normal(key, (n, n), dtype=jnp.float32)
    q, r = jnp.linalg.qr(a)
    q = q * jnp.sign(jnp.diag(r))
    return gain * q[:rows, :cols]


def make_params(key, d_in, h):
    """Unfused ('PyTorch-layout, transposed') parameters for the reference."""
    ks = jax.random.split(key, 4)
    w1 = _orthogonal(ks[0], (h, d_in)).T                  # (D_in, H)
    b1 = jnp.zeros((1, h), jnp.float32)
    w_ih = _orthogonal(ks[1], (3 * h, h))                 # rows [r, z, n]
    w_hh = _orthogonal(ks[2], (3 * h, h))
    w_ir, w_iz, w_in = w_ih[0:h].T, w_ih[h:2 * h].T, w_ih[2 * h:3 * h].T
    w_hr, w_hz, w_hn = w_hh[0:h].T, w_hh[h:2 * h].T, w_hh[2 * h:3 * h].T
    zb = jnp.zeros((1, h), jnp.float32)
    w2 = _orthogonal(ks[3], (1, h)).T                     # (H, 1)
    b2 = jnp.zeros((1, 1), jnp.float32)
    return dict(
        w1=w1, b1=b1,
        w_ir=w_ir, w_iz=w_iz, w_in=w_in,
        w_hr=w_hr, w_hz=w_hz, w_hn=w_hn,
        b_ir=zb, b_iz=zb, b_in=zb,
        b_hr=zb, b_hz=zb, b_hn=zb,
        w2=w2, b2=b2,
    )


def pack_params(p):
    """Fuse parameters into the 3 kernel operands (w1, w_gru, consts)."""
    h = p["w_ir"].shape[0]
    mxu_dt = jnp.bfloat16 if MXU_BF16 else jnp.float32
    zeros = jnp.zeros((h, h), jnp.float32)
    # (2H, 4H): top rows multiply `a`, bottom rows multiply `h`.
    w_gru = jnp.concatenate(
        [
            jnp.concatenate([p["w_ir"], p["w_iz"], p["w_in"], zeros], axis=1),
            jnp.concatenate([p["w_hr"], p["w_hz"], zeros, p["w_hn"]], axis=1),
        ],
        axis=0,
    ).astype(mxu_dt)
    w1 = p["w1"].astype(mxu_dt)
    # (8, H) f32 constants: [b1, b_r, b_z, b_in, b_hn, w2_row, b2_row, pad]
    consts = jnp.concatenate(
        [
            p["b1"],
            p["b_ir"] + p["b_hr"],
            p["b_iz"] + p["b_hz"],
            p["b_in"],
            p["b_hn"],
            p["w2"].T,
            jnp.full((1, h), p["b2"][0, 0], jnp.float32),
            jnp.zeros((1, h), jnp.float32),
        ],
        axis=0,
    )
    return w1, w_gru, consts


# ------------------------------- pure-JAX reference ----------------------------

def _reference(x_seq, h0, p):
    def step(h, x):
        pre = x @ p["w1"] + p["b1"]
        a = jnp.maximum(pre, 0.0) if USE_RELU else jnp.tanh(pre)
        r = jax.nn.sigmoid(a @ p["w_ir"] + p["b_ir"] + h @ p["w_hr"] + p["b_hr"])
        z = jax.nn.sigmoid(a @ p["w_iz"] + p["b_iz"] + h @ p["w_hz"] + p["b_hz"])
        n = jnp.tanh(a @ p["w_in"] + p["b_in"] + r * (h @ p["w_hn"] + p["b_hn"]))
        h_new = (1.0 - z) * n + z * h
        v = h_new @ p["w2"] + p["b2"]
        return h_new, v

    h_fin, vs = jax.lax.scan(step, h0, x_seq)
    return vs, h_fin


if __name__ == "__main__":
    key = jax.random.PRNGKey(0)
    T, B, D_IN, H = 8, 8, 16, 32     # trajectory len, batch, critic_input_dim, rnn_hidden_dim

    k_in, k_p = jax.random.split(key, 2)
    x_seq = jax.random.normal(k_in, (T, B, D_IN), dtype=jnp.float32)
    # self.rnn_hidden starts as None in torch -> GRUCell uses zeros.
    h0 = jnp.zeros((B, H), dtype=jnp.float32)

    params = make_params(k_p, D_IN, H)
    w1, w_gru, consts = pack_params(params)

    values, h_fin = critic_rnn_forward(x_seq, h0, w1, w_gru, consts)
    jax.block_until_ready((values, h_fin))

    v_ref, h_ref = _reference(x_seq, h0, params)
    assert values.shape == (T, B, 1) and h_fin.shape == (B, H)
    tol = 5e-2 if MXU_BF16 else 1e-5   # bf16 MXU operands loosen the f32-reference match
    assert jnp.allclose(values, v_ref, atol=tol, rtol=tol)
    assert jnp.allclose(h_fin, h_ref, atol=tol, rtol=tol)

    print("KERNEL_OK")
</pallas_src>

<mosaic_0001>
module attributes {stable_mosaic.version = 11 : i64} {
  func.func @_critic_rnn_kernel(%arg0: i32, %arg1: memref<1x8x16xf32, #tpu.memory_space<vmem>>, %arg2: memref<8x32xf32, #tpu.memory_space<vmem>>, %arg3: memref<16x32xbf16, #tpu.memory_space<vmem>>, %arg4: memref<64x128xbf16, #tpu.memory_space<vmem>>, %arg5: memref<8x32xf32, #tpu.memory_space<vmem>>, %arg6: memref<1x8x1xf32, #tpu.memory_space<vmem>>, %arg7: memref<8x32xf32, #tpu.memory_space<vmem>>, %arg8: memref<8x32xf32, #tpu.memory_space<vmem>>) attributes {dimension_semantics = [#tpu.dimension_semantics<arbitrary>], iteration_bounds = array<i64: 8>, scalar_prefetch = 0 : i64, scratch_operands = 1 : i64, tpu.core_type = #tpu.core_type<tc>, window_params = [{transform_indices = @transform_0, window_bounds = array<i64: 1, 8, 16>}, {pipeline_mode = #tpu.pipeline_mode<synchronous>, transform_indices = @transform_1, window_bounds = array<i64: 8, 32>}, {pipeline_mode = #tpu.pipeline_mode<synchronous>, transform_indices = @transform_2, window_bounds = array<i64: 16, 32>}, {pipeline_mode = #tpu.pipeline_mode<synchronous>, transform_indices = @transform_3, window_bounds = array<i64: 64, 128>}, {pipeline_mode = #tpu.pipeline_mode<synchronous>, transform_indices = @transform_4, window_bounds = array<i64: 8, 32>}, {transform_indices = @transform_5, window_bounds = array<i64: 1, 8, 1>}, {pipeline_mode = #tpu.pipeline_mode<synchronous>, transform_indices = @transform_6, window_bounds = array<i64: 8, 32>}]} {
    %c0_i32 = arith.constant 0 : i32
    %0 = arith.cmpi eq, %arg0, %c0_i32 : i32
    %1 = arith.extui %0 : i1 to i32
    %c0_i32_0 = arith.constant 0 : i32
    %2 = arith.cmpi ne, %1, %c0_i32_0 : i32
    scf.if %2 {
      %c0_29 = arith.constant 0 : index
      %c0_30 = arith.constant 0 : index
      %65 = vector.load %arg2[%c0_29, %c0_30] : memref<8x32xf32, #tpu.memory_space<vmem>>, vector<8x32xf32>
      %c0_31 = arith.constant 0 : index
      %c0_32 = arith.constant 0 : index
      %66 = vector.load %arg8[%c0_31, %c0_32] : memref<8x32xf32, #tpu.memory_space<vmem>>, vector<8x32xf32>
      tpu.vector_store %arg8[%c0_31, %c0_32], %65 {strides = array<i32>} : memref<8x32xf32, #tpu.memory_space<vmem>>, vector<8x32xf32>,
    } else {
    }
    %c0 = arith.constant 0 : index
    %c0_1 = arith.constant 0 : index
    %3 = vector.load %arg5[%c0, %c0_1] : memref<8x32xf32, #tpu.memory_space<vmem>>, vector<1x32xf32>
    %c1 = arith.constant 1 : index
    %c0_2 = arith.constant 0 : index
    %4 = vector.load %arg5[%c1, %c0_2] : memref<8x32xf32, #tpu.memory_space<vmem>>, vector<1x32xf32>
    %c2 = arith.constant 2 : index
    %c0_3 = arith.constant 0 : index
    %5 = vector.load %arg5[%c2, %c0_3] : memref<8x32xf32, #tpu.memory_space<vmem>>, vector<1x32xf32>
    %c3 = arith.constant 3 : index
    %c0_4 = arith.constant 0 : index
    %6 = vector.load %arg5[%c3, %c0_4] : memref<8x32xf32, #tpu.memory_space<vmem>>, vector<1x32xf32>
    %c4 = arith.constant 4 : index
    %c0_5 = arith.constant 0 : index
    %7 = vector.load %arg5[%c4, %c0_5] : memref<8x32xf32, #tpu.memory_space<vmem>>, vector<1x32xf32>
    %c5 = arith.constant 5 : index
    %c0_6 = arith.constant 0 : index
    %8 = vector.load %arg5[%c5, %c0_6] : memref<8x32xf32, #tpu.memory_space<vmem>>, vector<1x32xf32>
    %c6 = arith.constant 6 : index
    %c0_7 = arith.constant 0 : index
    %9 = vector.load %arg5[%c6, %c0_7] : memref<8x32xf32, #tpu.memory_space<vmem>>, vector<1x32xf32>
    %10 = vector.extract_strided_slice %9 {offsets = [0, 0], sizes = [1, 1], strides = [1, 1]} : vector<1x32xf32> to vector<1x1xf32>
    %c0_8 = arith.constant 0 : index
    %c0_9 = arith.constant 0 : index
    %c0_10 = arith.constant 0 : index
    %11 = vector.load %arg1[%c0_8, %c0_9, %c0_10] : memref<1x8x16xf32, #tpu.memory_space<vmem>>, vector<1x8x16xf32>
    %12 = vector.shape_cast %11 : vector<1x8x16xf32> to vector<8x16xf32>
    %c0_11 = arith.constant 0 : index
    %c0_12 = arith.constant 0 : index
    %13 = vector.load %arg8[%c0_11, %c0_12] : memref<8x32xf32, #tpu.memory_space<vmem>>, vector<8x32xf32>
    %14 = arith.truncf %12 : vector<8x16xf32> to vector<8x16xbf16>
    %c0_13 = arith.constant 0 : index
    %c0_14 = arith.constant 0 : index
    %15 = vector.load %arg3[%c0_13, %c0_14] : memref<16x32xbf16, #tpu.memory_space<vmem>>, vector<16x32xbf16>
    %cst = arith.constant dense<0.000000e+00> : vector<8x32xf32>
    %16 = tpu.matmul %14, %15, %cst {dimension_numbers = #tpu.dot_dimension_numbers<[1], [0], [0], [1], [0, 0, 1, 1], [], []>} : vector<8x16xbf16>, vector<16x32xbf16>, vector<8x32xf32> -> vector<8x32xf32>
    %17 = vector.broadcast %3 : vector<1x32xf32> to vector<8x32xf32>
    %18 = arith.addf %16, %17 : vector<8x32xf32>
    %19 = math.tanh %18 : vector<8x32xf32>
    %20 = arith.truncf %19 : vector<8x32xf32> to vector<8x32xbf16>
    %21 = arith.truncf %13 : vector<8x32xf32> to vector<8x32xbf16>
    %22 = tpu.concatenate %20, %21 in 1 : vector<8x32xbf16>, vector<8x32xbf16> -> vector<8x64xbf16>
    %c0_15 = arith.constant 0 : index
    %c0_16 = arith.constant 0 : index
    %23 = vector.load %arg4[%c0_15, %c0_16] : memref<64x128xbf16, #tpu.memory_space<vmem>>, vector<64x128xbf16>
    %cst_17 = arith.constant dense<0.000000e+00> : vector<8x128xf32>
    %24 = tpu.matmul %22, %23, %cst_17 {dimension_numbers = #tpu.dot_dimension_numbers<[1], [0], [0], [1], [0, 0, 1, 1], [], []>} : vector<8x64xbf16>, vector<64x128xbf16>, vector<8x128xf32> -> vector<8x128xf32>
    %25 = vector.extract_strided_slice %24 {offsets = [0, 0], sizes = [8, 32], strides = [1, 1]} : vector<8x128xf32> to vector<8x32xf32>
    %26 = vector.broadcast %4 : vector<1x32xf32> to vector<8x32xf32>
    %27 = arith.addf %25, %26 : vector<8x32xf32>
    %28 = arith.negf %27 : vector<8x32xf32>
    %29 = math.exp %28 : vector<8x32xf32>
    %cst_18 = arith.constant 1.000000e+00 : f32
    %30 = vector.broadcast %cst_18 : f32 to vector<8x32xf32>
    %31 = arith.addf %30, %29 : vector<8x32xf32>
    %32 = arith.divf %30, %31 : vector<8x32xf32>
    %33 = vector.extract_strided_slice %24 {offsets = [0, 32], sizes = [8, 32], strides = [1, 1]} : vector<8x128xf32> to vector<8x32xf32>
    %34 = vector.broadcast %5 : vector<1x32xf32> to vector<8x32xf32>
    %35 = arith.addf %33, %34 : vector<8x32xf32>
    %36 = arith.negf %35 : vector<8x32xf32>
    %37 = math.exp %36 : vector<8x32xf32>
    %cst_19 = arith.constant 1.000000e+00 : f32
    %38 = vector.broadcast %cst_19 : f32 to vector<8x32xf32>
    %39 = arith.addf %38, %37 : vector<8x32xf32>
    %40 = arith.divf %38, %39 : vector<8x32xf32>
    %41 = vector.extract_strided_slice %24 {offsets = [0, 64], sizes = [8, 32], strides = [1, 1]} : vector<8x128xf32> to vector<8x32xf32>
    %42 = vector.broadcast %6 : vector<1x32xf32> to vector<8x32xf32>
    %43 = arith.addf %41, %42 : vector<8x32xf32>
    %44 = vector.extract_strided_slice %24 {offsets = [0, 96], sizes = [8, 32], strides = [1, 1]} : vector<8x128xf32> to vector<8x32xf32>
    %45 = vector.broadcast %7 : vector<1x32xf32> to vector<8x32xf32>
    %46 = arith.addf %44, %45 : vector<8x32xf32>
    %47 = arith.mulf %32, %46 : vector<8x32xf32>
    %48 = arith.addf %43, %47 : vector<8x32xf32>
    %49 = math.tanh %48 : vector<8x32xf32>
    %cst_20 = arith.constant 1.000000e+00 : f32
    %50 = vector.broadcast %cst_20 : f32 to vector<8x32xf32>
    %51 = arith.subf %50, %40 : vector<8x32xf32>
    %52 = arith.mulf %51, %49 : vector<8x32xf32>
    %53 = arith.mulf %40, %13 : vector<8x32xf32>
    %54 = arith.addf %52, %53 : vector<8x32xf32>
    %55 = vector.broadcast %8 : vector<1x32xf32> to vector<8x32xf32>
    %56 = arith.mulf %54, %55 : vector<8x32xf32>
    %cst_21 = arith.constant dense<0.000000e+00> : vector<8xf32>
    %57 = vector.multi_reduction <add>, %56, %cst_21 [1] : vector<8x32xf32> to vector<8xf32>
    %58 = vector.shape_cast %57 : vector<8xf32> to vector<8x1xf32>
    %59 = vector.broadcast %10 : vector<1x1xf32> to vector<8x1xf32>
    %60 = arith.addf %58, %59 : vector<8x1xf32>
    %c0_22 = arith.constant 0 : index
    %c0_23 = arith.constant 0 : index
    %61 = vector.load %arg8[%c0_22, %c0_23] : memref<8x32xf32, #tpu.memory_space<vmem>>, vector<8x32xf32>
    tpu.vector_store %arg8[%c0_22, %c0_23], %54 {strides = array<i32>} : memref<8x32xf32, #tpu.memory_space<vmem>>, vector<8x32xf32>,
    %c0_24 = arith.constant 0 : index
    %c0_25 = arith.constant 0 : index
    %62 = vector.load %arg7[%c0_24, %c0_25] : memref<8x32xf32, #tpu.memory_space<vmem>>, vector<8x32xf32>
    tpu.vector_store %arg7[%c0_24, %c0_25], %54 {strides = array<i32>} : memref<8x32xf32, #tpu.memory_space<vmem>>, vector<8x32xf32>,
    %63 = vector.shape_cast %60 : vector<8x1xf32> to vector<1x8x1xf32>
    %c0_26 = arith.constant 0 : index
    %c0_27 = arith.constant 0 : index
    %c0_28 = arith.constant 0 : index
    %64 = vector.load %arg6[%c0_26, %c0_27, %c0_28] : memref<1x8x1xf32, #tpu.memory_space<vmem>>, vector<1x8x1xf32>
    tpu.vector_store %arg6[%c0_26, %c0_27, %c0_28], %63 {strides = array<i32>} : memref<1x8x1xf32, #tpu.memory_space<vmem>>, vector<1x8x1xf32>,
    return
  }
  func.func @transform_0(%arg0: i32) -> (i32, i32, i32) {
    %c0_i32 = arith.constant 0 : i32
    %c0_i32_0 = arith.constant 0 : i32
    %c0_i32_1 = arith.constant 0 : i32
    return %arg0, %c0_i32, %c0_i32_0 : i32, i32, i32
  }
  func.func @transform_1(%arg0: i32) -> (i32, i32) {
    %c0_i32 = arith.constant 0 : i32
    %c0_i32_0 = arith.constant 0 : i32
    %c0_i32_1 = arith.constant 0 : i32
    return %c0_i32, %c0_i32_0 : i32, i32
  }
  func.func @transform_2(%arg0: i32) -> (i32, i32) {
    %c0_i32 = arith.constant 0 : i32
    %c0_i32_0 = arith.constant 0 : i32
    %c0_i32_1 = arith.constant 0 : i32
    return %c0_i32, %c0_i32_0 : i32, i32
  }
  func.func @transform_3(%arg0: i32) -> (i32, i32) {
    %c0_i32 = arith.constant 0 : i32
    %c0_i32_0 = arith.constant 0 : i32
    %c0_i32_1 = arith.constant 0 : i32
    return %c0_i32, %c0_i32_0 : i32, i32
  }
  func.func @transform_4(%arg0: i32) -> (i32, i32) {
    %c0_i32 = arith.constant 0 : i32
    %c0_i32_0 = arith.constant 0 : i32
    %c0_i32_1 = arith.constant 0 : i32
    return %c0_i32, %c0_i32_0 : i32, i32
  }
  func.func @transform_5(%arg0: i32) -> (i32, i32, i32) {
    %c0_i32 = arith.constant 0 : i32
    %c0_i32_0 = arith.constant 0 : i32
    %c0_i32_1 = arith.constant 0 : i32
    return %arg0, %c0_i32, %c0_i32_0 : i32, i32, i32
  }
  func.func @transform_6(%arg0: i32) -> (i32, i32) {
    %c0_i32 = arith.constant 0 : i32
    %c0_i32_0 = arith.constant 0 : i32
    %c0_i32_1 = arith.constant 0 : i32
    return %c0_i32, %c0_i32_0 : i32, i32
  }
}

</mosaic_0001>

<llo_original>
// kernel: critic_rnn_forward.1
$region0: #{critic_rnn_forward.1}
  #allocation0 [shape = 'u32[]', space=smem, size = 0x4, offset = 0x4, fixed_abs, tag = 'smem constant byte address 0x4 - core index']
  #allocation1 [shape = 'u32[72,128]{1,0:T(1,128)}', space=vmem, size = 0x9000, scoped, tag = 'internal scratch']
  #allocation2 [shape = 'f32[8,32]{1,0:T(8,128)}', space=vmem, size = 0x1000, scoped, tag = 'scratch operand']
  %s0 = inlined_call_operand.hbm [shape: f32[8,8,16], index: 0, kind: input, shape index: {}]
  %s1 = inlined_call_operand.hbm [shape: f32[8,32], index: 1, kind: input, shape index: {}]
  %s2 = inlined_call_operand.hbm [shape: bf16[16,32], index: 2, kind: input, shape index: {}]
  %s3 = inlined_call_operand.hbm [shape: bf16[64,128], index: 3, kind: input, shape index: {}]
  %s4 = inlined_call_operand.hbm [shape: f32[8,32], index: 4, kind: input, shape index: {}]
  %s5 = inlined_call_operand.vmem [shape: f32[8,8,1], index: 5, kind: output, shape index: {0}]
  %s6 = inlined_call_operand.hbm [shape: f32[8,32], index: 6, kind: output, shape index: {1}]
  %7 = xla_tuple %s5, %s6
  %s8 = sld [smem:[#allocation0]]
  $region85: #{critic_rnn_forward.1} parent=0
    _
  %s10 = ssub.s32 1, %s8
  %s11 = scalar_select 0, %s10, %s8
  $region1: #{critic_rnn_forward.1} parent=0
    #allocation3 [shape = 'u8[8192]{0}', space=vmem, size = 0x2000, scoped, tag = 'input window, operand 0']
    #allocation4 [shape = 's32[2]{0}', space=sflag, size = 0x8, scoped, tag = 'scoped memory for critic_rnn_forward.1']
    #allocation5 [shape = 's32[2]{0}', space=sflag, size = 0x8, scoped, tag = 'scoped memory for critic_rnn_forward.1']
    #allocation6 [shape = 'u8[4096]{0}', space=vmem, size = 0x1000, scoped, tag = 'input window, operand 1, single buffered']
    #allocation7 [shape = 's32[1]{0}', space=sflag, size = 0x4, scoped, tag = 'scoped memory for critic_rnn_forward.1']
    #allocation8 [shape = 'u8[4096]{0}', space=vmem, size = 0x1000, scoped, tag = 'input window, operand 2, single buffered']
    #allocation9 [shape = 'u8[16384]{0}', space=vmem, size = 0x4000, scoped, tag = 'input window, operand 3, single buffered']
    #allocation10 [shape = 's32[1]{0}', space=sflag, size = 0x4, scoped, tag = 'scoped memory for critic_rnn_forward.1']
    #allocation11 [shape = 'u8[4096]{0}', space=vmem, size = 0x1000, scoped, tag = 'input window, operand 4, single buffered']
    #allocation12 [shape = 'u8[4096]{0}', space=vmem, size = 0x1000, scoped, tag = 'output window, operand 1, single buffered']
    %12 = vsyncpa [#allocation4], 0
    %s13 = scalar_lea.sflag [#allocation4], 1
    %14 = vsyncpa %s13, 0
    %15 = vsyncpa [#allocation7], 0
    %16 = vsyncpa [#allocation10], 0
    %17 = vsyncpa [#allocation5], 0
    loop: start=0, step=1, limit=10
    $region2: #{critic_rnn_forward.1} parent=1 // loop_pre_header
      _
    $region3: #{critic_rnn_forward.1} parent=1 // loop_header
      %s19 = sphi 0, %s23
      %p20 = scmp.ge.s32.totalorder %s19, 10
      %s29 = sphi 0, %s31
      %s32 = sphi 0, %s29
      %s33 = sphi 0, %s32
      %s49 = sphi 0, %s33
      %s53 = sphi 0, %s53
      %s55 = sphi 0, %s53
      %s56 = sphi 0, %s55
      %s70 = sphi 0, %s56
      %s74 = sphi 0, %s74
      %s76 = sphi 0, %s74
      %s77 = sphi 0, %s76
      %s91 = sphi 0, %s77
      %s95 = sphi 0, %s95
      %s97 = sphi 0, %s95
      %s98 = sphi 0, %s97
      %s112 = sphi 0, %s98
      %s116 = sphi 0, %s116
      %s118 = sphi 0, %s116
      %s119 = sphi 0, %s118
      %s133 = sphi 0, %s119
      %s139 = sphi 0, %s141
      %s142 = sphi 0, %s139
      %s143 = sphi 0, %s142
      %s159 = sphi 0, %s143
      %s163 = sphi 0, %s163
      %s165 = sphi 0, %s163
      %s166 = sphi 0, %s165
      %s180 = sphi 0, %s166
    $region4: #{critic_rnn_forward.1} parent=1 // loop_header_branch
      %22 = sbr.rel (%p20) target = $region8
    $region5: #{critic_rnn_forward.1} parent=1 // loop_body
      %s24 = ssub.s32 %s19, 1
      %s25 = ssub.s32 %s19, 2
      %s26 = sadd.s32 %s19, 1
      %s27 = ssub.s32 %s19, %s26
      %p28 = scmp.eq.s32.totalorder %s27, 0
      %s30 = sadd.s32 %s29, 1
      %s31 = scalar_select %p28, %s29, %s30
      %p34 = pneg %p28
      %p35 = scmp.eq.s32.totalorder %s19, 7
      %p36 = por %p34, %p35
      %p37 = scmp.ne.s32.totalorder %s29, %s32
      %p38 = scmp.eq.s32.totalorder %s19, 0
      %p39 = por %p37, %p38
      %p40 = scmp.ne.s32.totalorder %s29, %s32
      %p41 = scmp.eq.s32.totalorder %s24, 7
      %p42 = por %p40, %p41
      %p43 = scmp.ne.s32.totalorder %s32, %s33
      %p44 = scmp.eq.s32.totalorder %s24, 0
      %p45 = por %p43, %p44
      %p46 = scmp.ne.s32.totalorder %s32, %s33
      %p47 = scmp.eq.s32.totalorder %s25, 7
      %p48 = por %p46, %p47
      %p50 = scmp.ne.s32.totalorder %s33, %s49
      %p51 = scmp.eq.s32.totalorder %s25, 0
      %p52 = por %p50, %p51
      %s54 = sadd.s32 %s53, 1
      %p57 = scmp.eq.s32.totalorder %s19, 7
      %p58 = scmp.ne.s32.totalorder %s53, %s55
      %p59 = scmp.eq.s32.totalorder %s19, 0
      %p60 = por %p58, %p59
      %p61 = scmp.ne.s32.totalorder %s53, %s55
      %p62 = scmp.eq.s32.totalorder %s24, 7
      %p63 = por %p61, %p62
      %p64 = scmp.ne.s32.totalorder %s55, %s56
      %p65 = scmp.eq.s32.totalorder %s24, 0
      %p66 = por %p64, %p65
      %p67 = scmp.ne.s32.totalorder %s55, %s56
      %p68 = scmp.eq.s32.totalorder %s25, 7
      %p69 = por %p67, %p68
      %p71 = scmp.ne.s32.totalorder %s56, %s70
      %p72 = scmp.eq.s32.totalorder %s25, 0
      %p73 = por %p71, %p72
      %s75 = sadd.s32 %s74, 1
      %p78 = scmp.eq.s32.totalorder %s19, 7
      %p79 = scmp.ne.s32.totalorder %s74, %s76
      %p80 = scmp.eq.s32.totalorder %s19, 0
      %p81 = por %p79, %p80
      %p82 = scmp.ne.s32.totalorder %s74, %s76
      %p83 = scmp.eq.s32.totalorder %s24, 7
      %p84 = por %p82, %p83
      %p85 = scmp.ne.s32.totalorder %s76, %s77
      %p86 = scmp.eq.s32.totalorder %s24, 0
      %p87 = por %p85, %p86
      %p88 = scmp.ne.s32.totalorder %s76, %s77
      %p89 = scmp.eq.s32.totalorder %s25, 7
      %p90 = por %p88, %p89
      %p92 = scmp.ne.s32.totalorder %s77, %s91
      %p93 = scmp.eq.s32.totalorder %s25, 0
      %p94 = por %p92, %p93
      %s96 = sadd.s32 %s95, 1
      %p99 = scmp.eq.s32.totalorder %s19, 7
      %p100 = scmp.ne.s32.totalorder %s95, %s97
      %p101 = scmp.eq.s32.totalorder %s19, 0
      %p102 = por %p100, %p101
      %p103 = scmp.ne.s32.totalorder %s95, %s97
      %p104 = scmp.eq.s32.totalorder %s24, 7
      %p105 = por %p103, %p104
      %p106 = scmp.ne.s32.totalorder %s97, %s98
      %p107 = scmp.eq.s32.totalorder %s24, 0
      %p108 = por %p106, %p107
      %p109 = scmp.ne.s32.totalorder %s97, %s98
      %p110 = scmp.eq.s32.totalorder %s25, 7
      %p111 = por %p109, %p110
      %p113 = scmp.ne.s32.totalorder %s98, %s112
      %p114 = scmp.eq.s32.totalorder %s25, 0
      %p115 = por %p113, %p114
      %s117 = sadd.s32 %s116, 1
      %p120 = scmp.eq.s32.totalorder %s19, 7
      %p121 = scmp.ne.s32.totalorder %s116, %s118
      %p122 = scmp.eq.s32.totalorder %s19, 0
      %p123 = por %p121, %p122
      %p124 = scmp.ne.s32.totalorder %s116, %s118
      %p125 = scmp.eq.s32.totalorder %s24, 7
      %p126 = por %p124, %p125
      %p127 = scmp.ne.s32.totalorder %s118, %s119
      %p128 = scmp.eq.s32.totalorder %s24, 0
      %p129 = por %p127, %p128
      %p130 = scmp.ne.s32.totalorder %s118, %s119
      %p131 = scmp.eq.s32.totalorder %s25, 7
      %p132 = por %p130, %p131
      %p134 = scmp.ne.s32.totalorder %s119, %s133
      %p135 = scmp.eq.s32.totalorder %s25, 0
      %p136 = por %p134, %p135
      %s137 = ssub.s32 %s19, %s26
      %p138 = scmp.eq.s32.totalorder %s137, 0
      %s140 = sadd.s32 %s139, 1
      %s141 = scalar_select %p138, %s139, %s140
      %p144 = pneg %p138
      %p145 = scmp.eq.s32.totalorder %s19, 7
      %p146 = por %p144, %p145
      %p147 = scmp.ne.s32.totalorder %s139, %s142
      %p148 = scmp.eq.s32.totalorder %s19, 0
      %p149 = por %p147, %p148
      %p150 = scmp.ne.s32.totalorder %s139, %s142
      %p151 = scmp.eq.s32.totalorder %s24, 7
      %p152 = por %p150, %p151
      %p153 = scmp.ne.s32.totalorder %s142, %s143
      %p154 = scmp.eq.s32.totalorder %s24, 0
      %p155 = por %p153, %p154
      %p156 = scmp.ne.s32.totalorder %s142, %s143
      %p157 = scmp.eq.s32.totalorder %s25, 7
      %p158 = por %p156, %p157
      %p160 = scmp.ne.s32.totalorder %s143, %s159
      %p161 = scmp.eq.s32.totalorder %s25, 0
      %p162 = por %p160, %p161
      %s164 = sadd.s32 %s163, 1
      %p167 = scmp.eq.s32.totalorder %s19, 7
      %p168 = scmp.ne.s32.totalorder %s163, %s165
      %p169 = scmp.eq.s32.totalorder %s19, 0
      %p170 = por %p168, %p169
      %p171 = scmp.ne.s32.totalorder %s163, %s165
      %p172 = scmp.eq.s32.totalorder %s24, 7
      %p173 = por %p171, %p172
      %p174 = scmp.ne.s32.totalorder %s165, %s166
      %p175 = scmp.eq.s32.totalorder %s24, 0
      %p176 = por %p174, %p175
      %p177 = scmp.ne.s32.totalorder %s165, %s166
      %p178 = scmp.eq.s32.totalorder %s25, 7
      %p179 = por %p177, %p178
      %p181 = scmp.ne.s32.totalorder %s166, %s180
      %p182 = scmp.eq.s32.totalorder %s25, 0
      %p183 = por %p181, %p182
      %p184 = scmp.le.s32.totalorder 1, %s19
      %p185 = scmp.lt.s32.totalorder %s19, 9
      %p186 = pnand %p184, %p185
      %p187 = pneg %p186
      // Predicated region
      $region9: #{critic_rnn_forward.1} parent=5 // pred_check
        _
      $region10: #{critic_rnn_forward.1} parent=5 // pred_check_branch
        %189 = sbr.rel (%p186) target = $region12
      $region11: #{critic_rnn_forward.1} parent=5 // pred_region
        %s190 = ssub.s32 %s19, 1
        // Predicated region
        $region13: #{critic_rnn_forward.1} parent=11 // pred_check
          %p191 = pneg %p66
        $region14: #{critic_rnn_forward.1} parent=11 // pred_check_branch
          %193 = sbr.rel (%p191) target = $region16
        $region15: #{critic_rnn_forward.1} parent=11 // pred_region
          %195 = vsyncadd [#allocation7], 0
          %s197 = sshll.u32 %s1, 4
          %s198 = int_to_ptr.hbm [resolvable:$true] %s197
          %s199 = sshll.u32 [#allocation6], 4
          %s200 = int_to_ptr.vmem [resolvable:$true] %s199
          %202 = dma.hbm_to_vmem [thread:$0]  %s198, 128, %s200, [#allocation7]
        $region16: #{critic_rnn_forward.1} parent=11 // pred_fallthru
          _
        // Predicated region
        $region17: #{critic_rnn_forward.1} parent=11 // pred_check
          %p203 = pneg %p87
        $region18: #{critic_rnn_forward.1} parent=11 // pred_check_branch
          %205 = sbr.rel (%p203) target = $region20
        $region19: #{critic_rnn_forward.1} parent=11 // pred_region
          %207 = vsyncadd [#allocation7], 0
          %s208 = sshll.u32 %s2, 4
          %s209 = int_to_ptr.hbm [resolvable:$true] %s208
          %s210 = sshll.u32 [#allocation8], 4
          %s211 = int_to_ptr.vmem [resolvable:$true] %s210
          %216 = dma.hbm_to_vmem [thread:$0]  %s209, 128, %s211, [#allocation7], 64, 64, 4
        $region20: #{critic_rnn_forward.1} parent=11 // pred_fallthru
          _
        // Predicated region
        $region21: #{critic_rnn_forward.1} parent=11 // pred_check
          %p217 = pneg %p108
        $region22: #{critic_rnn_forward.1} parent=11 // pred_check_branch
          %219 = sbr.rel (%p217) target = $region24
        $region23: #{critic_rnn_forward.1} parent=11 // pred_region
          %221 = vsyncadd [#allocation10], 0
          %s222 = sshll.u32 %s3, 4
          %s223 = int_to_ptr.hbm [resolvable:$true] %s222
          %s224 = sshll.u32 [#allocation9], 4
          %s225 = int_to_ptr.vmem [resolvable:$true] %s224
          %230 = dma.hbm_to_vmem [thread:$0]  %s223, 512, %s225, [#allocation10], 64, 64, 4
        $region24: #{critic_rnn_forward.1} parent=11 // pred_fallthru
          _
        // Predicated region
        $region25: #{critic_rnn_forward.1} parent=11 // pred_check
          %p231 = pneg %p129
        $region26: #{critic_rnn_forward.1} parent=11 // pred_check_branch
          %233 = sbr.rel (%p231) target = $region28
        $region27: #{critic_rnn_forward.1} parent=11 // pred_region
          %235 = vsyncadd [#allocation10], 0
          %s237 = sshll.u32 %s4, 4
          %s238 = int_to_ptr.hbm [resolvable:$true] %s237
          %s239 = sshll.u32 [#allocation11], 4
          %s240 = int_to_ptr.vmem [resolvable:$true] %s239
          %242 = dma.hbm_to_vmem [thread:$0]  %s238, 128, %s240, [#allocation10]
        $region28: #{critic_rnn_forward.1} parent=11 // pred_fallthru
          _
      $region12: #{critic_rnn_forward.1} parent=5 // pred_fallthru
        _
      %p243 = scmp.lt.s32.totalorder %s19, 8
      // Predicated region
      $region29: #{critic_rnn_forward.1} parent=5 // pred_check
        %p244 = pneg %p243
      $region30: #{critic_rnn_forward.1} parent=5 // pred_check_branch
        %246 = sbr.rel (%p244) target = $region32
      $region31: #{critic_rnn_forward.1} parent=5 // pred_region
        // Predicated region
        $region33: #{critic_rnn_forward.1} parent=31 // pred_check
          %p247 = pneg %p39
        $region34: #{critic_rnn_forward.1} parent=31 // pred_check_branch
          %249 = sbr.rel (%p247) target = $region36
        $region35: #{critic_rnn_forward.1} parent=31 // pred_region
          %s250 = sand.u32 %s29, 1
          %s251 = scalar_lea.sflag [#allocation4], %s250
          %s252 = sand.u32 %s29, 1
          %s253 = smul.addr %s252, 8
          %s254 = scalar_lea.vmem [#allocation3], %s253
          %256 = vsyncadd %s251, 0
          %s257 = smul.addr %s19, 8
          %s258 = scalar_lea.hbm %s0, %s257
          %s260 = sshll.u32 %s258, 4
          %s261 = int_to_ptr.hbm [resolvable:$true] %s260
          %s262 = sshll.u32 %s254, 4
          %s263 = int_to_ptr.vmem [resolvable:$true] %s262
          %265 = dma.hbm_to_vmem [thread:$0]  %s261, 128, %s263, %s251
        $region36: #{critic_rnn_forward.1} parent=31 // pred_fallthru
          _
      $region32: #{critic_rnn_forward.1} parent=5 // pred_fallthru
        _
      %p266 = scmp.le.s32.totalorder 1, %s19
      %p267 = scmp.lt.s32.totalorder %s19, 9
      %p268 = pnand %p266, %p267
      %p269 = pneg %p268
      // Predicated region
      $region37: #{critic_rnn_forward.1} parent=5 // pred_check
        _
      $region38: #{critic_rnn_forward.1} parent=5 // pred_check_branch
        %271 = sbr.rel (%p268) target = $region40
      $region39: #{critic_rnn_forward.1} parent=5 // pred_region
        %s272 = ssub.s32 %s19, 1
        %s273 = sand.u32 %s32, 1
        %s274 = scalar_lea.sflag [#allocation4], %s273
        %s275 = sand.u32 %s32, 1
        %s276 = smul.addr %s275, 8
        %s277 = scalar_lea.vmem [#allocation3], %s276
        // Predicated region
        $region41: #{critic_rnn_forward.1} parent=39 // pred_check
          %p278 = pneg %p45
        $region42: #{critic_rnn_forward.1} parent=39 // pred_check_branch
          %280 = sbr.rel (%p278) target = $region44
        $region43: #{critic_rnn_forward.1} parent=39 // pred_region
          %282 = dma.done %s274, 128
        $region44: #{critic_rnn_forward.1} parent=39 // pred_fallthru
          _
        // Predicated region
        $region45: #{critic_rnn_forward.1} parent=39 // pred_check
          %p283 = pneg %p66
        $region46: #{critic_rnn_forward.1} parent=39 // pred_check_branch
          %285 = sbr.rel (%p283) target = $region48
        $region47: #{critic_rnn_forward.1} parent=39 // pred_region
          %287 = dma.done [#allocation7], 128
        $region48: #{critic_rnn_forward.1} parent=39 // pred_fallthru
          _
        // Predicated region
        $region49: #{critic_rnn_forward.1} parent=39 // pred_check
          %p288 = pneg %p87
        $region50: #{critic_rnn_forward.1} parent=39 // pred_check_branch
          %290 = sbr.rel (%p288) target = $region52
        $region51: #{critic_rnn_forward.1} parent=39 // pred_region
          %292 = dma.done [#allocation7], 128
        $region52: #{critic_rnn_forward.1} parent=39 // pred_fallthru
          _
        // Predicated region
        $region53: #{critic_rnn_forward.1} parent=39 // pred_check
          %p293 = pneg %p108
        $region54: #{critic_rnn_forward.1} parent=39 // pred_check_branch
          %295 = sbr.rel (%p293) target = $region56
        $region55: #{critic_rnn_forward.1} parent=39 // pred_region
          %297 = dma.done [#allocation10], 512
        $region56: #{critic_rnn_forward.1} parent=39 // pred_fallthru
          _
        // Predicated region
        $region57: #{critic_rnn_forward.1} parent=39 // pred_check
          %p298 = pneg %p129
        $region58: #{critic_rnn_forward.1} parent=39 // pred_check_branch
          %300 = sbr.rel (%p298) target = $region60
        $region59: #{critic_rnn_forward.1} parent=39 // pred_region
          %302 = dma.done [#allocation10], 128
        $region60: #{critic_rnn_forward.1} parent=39 // pred_fallthru
          _
        %s303 = sand.u32 %s32, 1
        %s304 = scalar_lea.sflag [#allocation4], %s303
        %s305 = sand.u32 %s32, 1
        %s306 = smul.addr %s305, 8
        %s307 = scalar_lea.vmem [#allocation3], %s306
        %p308 = pneg %p45
        %p309 = pneg %p42
        %p310 = pneg %p66
        %p311 = pneg %p63
        %p312 = pneg %p87
        %p313 = pneg %p84
        %p314 = pneg %p108
        %p315 = pneg %p105
        %p316 = pneg %p129
        %p317 = pneg %p126
        %p318 = pneg %p155
        %p319 = pneg %p152
        %p320 = scmp.lt.s32.totalorder %s24, 7
        %s321 = scalar_select %p320, %s24, 7
        %s322 = smul.addr %s321, 8
        %s323 = scalar_lea.vmem %s5, %s322
        %p324 = pneg %p176
        %p325 = pneg %p173
        %p326 = scmp.lt.s32.totalorder %s24, 7
        %s327 = scalar_select %p326, %s24, 7
        %s328 = smul.addr %s327, 8
        %s329 = scalar_lea.vmem %s5, %s328
        %p331 = scmp.eq.s32.totalorder %s24, 0
        // Predicated region
        $region61: #{critic_rnn_forward.1} parent=39 // pred_check
          %p332 = pneg %p331
        $region62: #{critic_rnn_forward.1} parent=39 // pred_check_branch
          %334 = sbr.rel (%p332) target = $region64
        $region63: #{critic_rnn_forward.1} parent=39 // pred_region
          %v335 = vld [vmem:[#allocation6] sm:$0xff]
          %vm336 = vcmask 261120
          %337 = vst.msk [vmem:[#allocation2] sm:$0xff] %vm336, %v335
        $region64: #{critic_rnn_forward.1} parent=39 // pred_fallthru
          _
        %v338 = vld [vmem:[#allocation11] sm:$0x1]
        %v339 = vld [vmem:[#allocation11 + $0x1] sm:$0x1]
        %v340 = vld [vmem:[#allocation11 + $0x2] sm:$0x1]
        %v341 = vld [vmem:[#allocation11 + $0x3] sm:$0x1]
        %v342 = vld [vmem:[#allocation11 + $0x4] sm:$0x1]
        %v343 = vld [vmem:[#allocation11 + $0x5] sm:$0x1]
        %v344 = vld [vmem:[#allocation11 + $0x6] sm:$0x1]
        %v345 = vld [vmem:[%s277] sm:$0xff]
        %v346 = vld [vmem:[#allocation2] sm:$0xff]
        %v347 = vpack.c.bf16 %v345, %v345
        %v348 = vld [vmem:[#allocation8] sm:$0xf]
        %v349 = vld [vmem:[#allocation8 + $0x4] sm:$0xf]
        %v350 = vperm.slane %v338, 0
        %v353 = vunpack.c.l.b16 %v348
        %v354 = vunpack.c.l.b16 %v349
        %v355 = vpack.c.b16 %v354, %v353
        %vm357 = vcmask 130048
        %v359 = vsel %vm357, %v347, 0
        %361 = vmatpush.bf16.msra.mxu0 0
        %362 = vmatpush.bf16.msra.mxu0 0
        %363 = vmatpush.bf16.msra.mxu0 0
        %364 = vmatpush.bf16.msra.mxu0 0
        %365 = vmatpush.bf16.msra.mxu0 0
        %366 = vmatpush.bf16.msra.mxu0 0
        %367 = vmatpush.bf16.msra.mxu0 0
        %368 = vmatpush.bf16.msra.mxu0 %v355
        %369 = vmatmul.bf16.gmra.mxu0 %v359
        %v370 = vpop.f32.mrf.mxu0
        %v371 = vadd.f32 %v350, %v370
        %v372 = vpop.f32.mrf.mxu0
        %373 = vdwg.mxu0
        %v374 = vtanh.pop %v371
        %v375 = vpack.c.bf16 %v374, %v374
        %v376 = vpack.c.bf16 %v346, %v346
        %v378 = vunpack.c.l.b16 %v376
        %v379 = vpack.c.b16 %v378, %v378
        %380 = vrot.lane.b32.xlu0 %v379, 32
        %v381 = vpop.permute.xlu0 %380
        %vm382 = vcmask 261120
        %v385 = vsel %vm382, %v375, %v381
        %v386 = vld [vmem:[#allocation9] sm:$0xf]
        %v387 = vld [vmem:[#allocation9 + $0x4] sm:$0xf]
        %v388 = vld [vmem:[#allocation9 + $0x8] sm:$0xf]
        %v389 = vld [vmem:[#allocation9 + $0xc] sm:$0xf]
        %v390 = vld [vmem:[#allocation9 + $0x10] sm:$0xf]
        %v391 = vld [vmem:[#allocation9 + $0x14] sm:$0xf]
        %v392 = vld [vmem:[#allocation9 + $0x18] sm:$0xf]
        %v393 = vld [vmem:[#allocation9 + $0x1c] sm:$0xf]
        %v402 = vunpack.c.l.b16 %v386
        %v403 = vunpack.c.l.b16 %v387
        %v404 = vunpack.c.l.b16 %v388
        %v405 = vunpack.c.l.b16 %v389
        %v406 = vunpack.c.l.b16 %v390
        %v407 = vunpack.c.l.b16 %v391
        %v408 = vunpack.c.l.b16 %v392
        %v409 = vunpack.c.l.b16 %v393
        %v410 = vpack.c.b16 %v403, %v402
        %v411 = vpack.c.b16 %v405, %v404
        %v412 = vpack.c.b16 %v407, %v406
        %v413 = vpack.c.b16 %v409, %v408
        %vm418 = vcmask 523264
        %v419 = vsel %vm418, %v385, 0
        %421 = vmatpush.bf16.msra.mxu0 0
        %422 = vmatpush.bf16.msra.mxu0 0
        %423 = vmatpush.bf16.msra.mxu0 0
        %424 = vmatpush.bf16.msra.mxu0 0
        %425 = vmatpush.bf16.msra.mxu0 %v413
        %426 = vmatpush.bf16.msra.mxu0 %v412
        %427 = vmatpush.bf16.msra.mxu0 %v411
        %428 = vmatpush.bf16.msra.mxu0 %v410
        %429 = vmatmul.bf16.gmra.mxu0 %v419
        %v430 = vpop.f32.mrf.mxu0
        %v431 = vadd.f32 0.0, %v430
        %v432 = vpop.f32.mrf.mxu0
        %433 = vdwg.mxu0
        %v434 = vperm.slane %v339, 0
        %v435 = vadd.f32 %v431, %v434
        %v436 = vxor.u32 %v435, 2147483648
        %v437 = vmul.f32 %v436, 1.442695
        %v438 = vpow.pop %v437
        %v439 = vadd.f32 %v438, 1.0
        %v440 = vrcp.pop %v439
        %v441 = vmul.f32 %v439, %v440
        %v442 = vsub.f32 1.0, %v441
        %v443 = vmul.f32 %v440, %v442
        %v444 = vadd.f32 %v440, %v443
        %vm445 = vweird.f32 %v439
        %vm446 = vweird.f32 %v440
        %vm447 = vmor %vm445, %vm446
        %v448 = vsel %vm447, %v440, %v444
        %v449 = vand.u32 2147483647, %v439
        %vm450 = vcmp.eq.f32.partialorder %v449, 8.507059e+37
        %v451 = vand.u32 %v439, 2147483648
        %v452 = vor.u32 1.1754944e-38, %v451
        %v453 = vsel %vm450, %v452, %v448
        %v454 = vmul.f32 1.0, %v453
        %v455 = vperm.slane %v340, 0
        %457 = vrot.lane.b32.xlu0 %v455, 32
        %v458 = vpop.permute.xlu0 %457
        %v460 = vadd.f32 %v431, %v458
        %v461 = vxor.u32 %v460, 2147483648
        %v462 = vmul.f32 %v461, 1.442695
        %v463 = vpow.pop %v462
        %v464 = vadd.f32 %v463, 1.0
        %v465 = vrcp.pop %v464
        %v466 = vmul.f32 %v464, %v465
        %v467 = vsub.f32 1.0, %v466
        %v468 = vmul.f32 %v465, %v467
        %v469 = vadd.f32 %v465, %v468
        %vm470 = vweird.f32 %v464
        %vm471 = vweird.f32 %v465
        %vm472 = vmor %vm470, %vm471
        %v473 = vsel %vm472, %v465, %v469
        %v474 = vand.u32 2147483647, %v464
        %vm475 = vcmp.eq.f32.partialorder %v474, 8.507059e+37
        %v476 = vand.u32 %v464, 2147483648
        %v477 = vor.u32 1.1754944e-38, %v476
        %v478 = vsel %vm475, %v477, %v473
        %v479 = vmul.f32 1.0, %v478
        %v480 = vperm.slane %v341, 0
        %482 = vrot.lane.b32.xlu0 %v480, 64
        %v483 = vpop.permute.xlu0 %482
        %v485 = vadd.f32 %v431, %v483
        %v486 = vperm.slane %v342, 0
        %488 = vrot.lane.b32.xlu0 %v486, 96
        %v489 = vpop.permute.xlu0 %488
        %v491 = vadd.f32 %v431, %v489
        %493 = vrot.lane.b32.xlu0 %v491, 32
        %v494 = vpop.permute.xlu0 %493
        %v496 = vmul.f32 %v454, %v494
        %498 = vrot.lane.b32.xlu0 %v496, 64
        %v499 = vpop.permute.xlu0 %498
        %v501 = vadd.f32 %v485, %v499
        %v502 = vtanh.pop %v501
        %v503 = vsub.f32 1.0, %v479
        %505 = vrot.lane.b32.xlu0 %v502, 96
        %v506 = vpop.permute.xlu0 %505
        %v508 = vmul.f32 %v503, %v506
        %510 = vrot.lane.b32.xlu0 %v346, 32
        %v511 = vpop.permute.xlu0 %510
        %v513 = vmul.f32 %v479, %v511
        %v514 = vadd.f32 %v508, %v513
        %v515 = vperm.slane %v343, 0
        %517 = vrot.lane.b32.xlu0 %v515, 32
        %v518 = vpop.permute.xlu0 %517
        %v520 = vmul.f32 %v514, %v518
        %522 = vrot.lane.b32.xlu0 %v520, 96
        %v523 = vpop.permute.xlu0 %522
        %v525 = vsel %vm382, %v523, 0.0
        %526 = vadd.xlane.f32.xlu0 %v525
        %v527 = vpop.xlane.xlu0 %526
        %v528 = vperm.slane %v344, 0
        %v529 = vadd.f32 %v527, %v528
        %531 = vrot.lane.b32.xlu0 %v514, 96
        %v532 = vpop.permute.xlu0 %531
        %534 = vst.msk [vmem:[#allocation2] sm:$0xff] %vm382, %v532
        %535 = vst.msk [vmem:[#allocation12] sm:$0xff] %vm382, %v532
        %vm536 = vcmask 7168
        %537 = vst.msk [vmem:[%s329] sm:$0xff] %vm536, %v529
        %p538 = scmp.lt.s32.totalorder %s24, 7
        %s539 = scalar_select %p538, %s24, 7
        %s540 = smul.addr %s539, 8
        %s541 = scalar_lea.vmem %s5, %s540
        // Predicated region
        $region65: #{critic_rnn_forward.1} parent=39 // pred_check
          %p542 = pneg %p152
        $region66: #{critic_rnn_forward.1} parent=39 // pred_check_branch
          %544 = sbr.rel (%p542) target = $region68
        $region67: #{critic_rnn_forward.1} parent=39 // pred_region
          _
        $region68: #{critic_rnn_forward.1} parent=39 // pred_fallthru
          _
        // Predicated region
        $region69: #{critic_rnn_forward.1} parent=39 // pred_check
          %p545 = pneg %p173
        $region70: #{critic_rnn_forward.1} parent=39 // pred_check_branch
          %547 = sbr.rel (%p545) target = $region72
        $region71: #{critic_rnn_forward.1} parent=39 // pred_region
          %549 = vsyncadd [#allocation5], 0
          %s551 = sshll.u32 [#allocation12], 4
          %s552 = int_to_ptr.vmem [resolvable:$true] %s551
          %s553 = sshll.u32 %s6, 4
          %s554 = int_to_ptr.hbm [resolvable:$true] %s553
          %556 = dma.vmem_to_hbm [thread:$0]  %s552, 128, %s554, [#allocation5]
        $region72: #{critic_rnn_forward.1} parent=39 // pred_fallthru
          _
        // Predicated region
        $region73: #{critic_rnn_forward.1} parent=39 // pred_check
          %p557 = pneg %p173
        $region74: #{critic_rnn_forward.1} parent=39 // pred_check_branch
          %559 = sbr.rel (%p557) target = $region76
        $region75: #{critic_rnn_forward.1} parent=39 // pred_region
          %561 = dma.done [#allocation5], 128
        $region76: #{critic_rnn_forward.1} parent=39 // pred_fallthru
          _
      $region40: #{critic_rnn_forward.1} parent=5 // pred_fallthru
        _
      %p562 = scmp.le.s32.totalorder 2, %s19
      // Predicated region
      $region77: #{critic_rnn_forward.1} parent=5 // pred_check
        %p563 = pneg %p562
      $region78: #{critic_rnn_forward.1} parent=5 // pred_check_branch
        %565 = sbr.rel (%p563) target = $region80
      $region79: #{critic_rnn_forward.1} parent=5 // pred_region
        %s566 = ssub.s32 %s19, 2
        // Predicated region
        $region81: #{critic_rnn_forward.1} parent=79 // pred_check
          %p567 = pneg %p158
        $region82: #{critic_rnn_forward.1} parent=79 // pred_check_branch
          %569 = sbr.rel (%p567) target = $region84
        $region83: #{critic_rnn_forward.1} parent=79 // pred_region
          %p570 = scmp.lt.s32.totalorder %s25, 7
          %s571 = scalar_select %p570, %s25, 7
          %s572 = smul.addr %s571, 8
          %s573 = scalar_lea.vmem %s5, %s572
        $region84: #{critic_rnn_forward.1} parent=79 // pred_fallthru
          _
      $region80: #{critic_rnn_forward.1} parent=5 // pred_fallthru
        _
    $region6: #{critic_rnn_forward.1} parent=1 // loop_footer
      %s23 = sadd.s32 1, %s19
    $region7: #{critic_rnn_forward.1} parent=1 // loop_footer_branch
      %18 = sbr.rel target = $region3
    $region8: #{critic_rnn_forward.1} parent=1 // loop_exit
      _
    %574 = vsyncpa [#allocation4], 1
    %s575 = scalar_lea.sflag [#allocation4], 1
    %576 = vsyncpa %s575, 1
    %577 = vsyncpa [#allocation7], 1
    %578 = vsyncpa [#allocation10], 1
    %579 = vsyncpa [#allocation5], 1
    %s580 = scalar_lea.sflag [#allocation5], 1
    %581 = vsyncpa %s580, 1

</llo_original>
